<compile_context>
chip_gen: v7x
topology: tpu7x:2x2x1
jax: 0.10.0
libtpu: 0.0.40
codegen_flags: <defaults>
</compile_context>

<pallas_src>
import functools

import jax
import jax.numpy as jnp
import numpy as np
from jax.experimental import pallas as pl
from jax.experimental.pallas import tpu as pltpu

EPS = 1e-5
LANES = 128

# Band accumulator is (<=128 rows, Cout_p) f32 -> one MXU-friendly M tile and a
# per-step footprint far below v7x's 64 MiB VMEM.  Re-derive for very wide
# images (W > 128 falls back to 1-row bands).
_MAX_BAND_ROWS = 128


def _pick_band_rows(H, W):
    """Largest divisor TH of H with TH*W <= _MAX_BAND_ROWS (fallback 1)."""
    for th in range(H, 0, -1):
        if H % th == 0 and th * W <= _MAX_BAND_ROWS:
            return th
    return 1


def _pick_band_group(S, band_bytes, cap=2 * 1024 * 1024):
    """Largest divisor G of S whose grouped block stays under `cap` bytes."""
    for g in range(S, 0, -1):
        if S % g == 0 and g * band_bytes <= cap:
            return g
    return 1


def _conv_stats_kernel(x_ref, w_ref, y_ref, sum_ref, sq_ref, slab_ref,
                       *, TH, W, Cin, Cout):
    """One (image, row-band) grid step: 3x3 conv + per-band BN partial sums.

    x_ref:    (1, TH+2, W+2, Cin)  bf16 replicate-padded input band (2-row halo)
    w_ref:    (9*Cin, Cout_p)      bf16 weight, K ordered (kh, kw, cin); resident
    y_ref:    (1, TH*W, Cout)      bf16 conv output band (real channels only)
    sum_ref:  (1, 1, Cout_p)       f32 per-band channel sum
    sq_ref:   (1, 1, Cout_p)       f32 per-band channel sum of squares
    slab_ref: (TH*W, 9*Cin)        bf16 VMEM scratch: the im2col slab
    """
    xb = x_ref[0]                                      # (TH+2, W+2, Cin)

    # Build the im2col slab once: 9 static-sliced taps, each a leading-dim
    # collapse (TH, W, Cin) -> (TH*W, Cin) plus a narrow static lane store.
    for kh in range(3):
        for kw in range(3):
            t = kh * 3 + kw
            tap = xb[kh:kh + TH, kw:kw + W, :].reshape(TH * W, Cin)
            slab_ref[:, t * Cin:(t + 1) * Cin] = tap

    # Single fat-K (K = 9*Cin) bf16 MXU matmul with f32 accumulation.
    acc = jnp.dot(slab_ref[...], w_ref[...],
                  preferred_element_type=jnp.float32)  # (TH*W, Cout_p)

    # bf16 intermediate, real channels only (stats are taken from the f32 acc
    # before the down-cast, so BN statistics stay f32-accurate).
    y_ref[0] = acc[:, :Cout].astype(y_ref.dtype)

    # Per-band partial BN statistics (grid-indexed -> grid stays "parallel").
    # NOTE: global var is later formed as E[x^2]-E[x]^2 in f32; adequate here,
    # switch to a Welford-style merge if this feeds tighter-accuracy consumers.
    sum_ref[0] = jnp.sum(acc, axis=0, keepdims=True)
    sq_ref[0] = jnp.sum(acc * acc, axis=0, keepdims=True)


def _bn_relu_kernel(y_ref, scale_ref, shift_ref, o_ref):
    """Normalize + affine + ReLU: o = max(y*scale + shift, 0). f32 epilogue."""
    y = y_ref[...].astype(jnp.float32)                 # (G, TH*W, Cout)
    o_ref[...] = jnp.maximum(
        y * scale_ref[...] + shift_ref[...], 0.0).astype(o_ref.dtype)


def conv_block_forward(x_nchw, weight_oihw, gamma, beta,
                       *, compute_dtype=jnp.bfloat16):
    """ConvBlock.forward. x: (N, Cin, H, W) NCHW; weight: (Cout, Cin, 3, 3)."""
    N, Cin, H, W = x_nchw.shape
    Cout = weight_oihw.shape[0]
    Cout_p = ((Cout + LANES - 1) // LANES) * LANES
    TH = _pick_band_rows(H, W)
    nb = H // TH
    S = N * nb                     # total row-bands = pass-1 grid size
    R = TH * W                     # output rows per band
    M = N * H * W                  # BN reduction size

    # ---- layout plumbing (XLA): NHWC + replicate pad + 2-row-halo band gather.
    x = jnp.transpose(x_nchw, (0, 2, 3, 1)).astype(compute_dtype)   # NHWC bf16
    x_pad = jnp.pad(x, ((0, 0), (1, 1), (1, 1), (0, 0)), mode="edge")
    row_idx = jnp.arange(nb)[:, None] * TH + jnp.arange(TH + 2)[None, :]
    x_bands = x_pad[:, row_idx].reshape(S, TH + 2, W + 2, Cin)

    # Weight as one (9*Cin, Cout_p) matrix, K ordered (kh, kw, cin); output
    # channels zero-padded to a full 128-lane MXU tile (sliced off in-kernel).
    w = jnp.transpose(weight_oihw, (2, 3, 1, 0)).reshape(9 * Cin, Cout)
    w = jnp.pad(w, ((0, 0), (0, Cout_p - Cout))).astype(compute_dtype)

    # ---- pass 1: banded conv (one fat-K MXU matmul per band) + partial stats.
    kern1 = functools.partial(_conv_stats_kernel, TH=TH, W=W, Cin=Cin, Cout=Cout)
    y, sums, sumsq = pl.pallas_call(
        kern1,
        out_shape=(jax.ShapeDtypeStruct((S, R, Cout), jnp.bfloat16),
                   jax.ShapeDtypeStruct((S, 1, Cout_p), jnp.float32),
                   jax.ShapeDtypeStruct((S, 1, Cout_p), jnp.float32)),
        grid=(S,),
        in_specs=[
            pl.BlockSpec((1, TH + 2, W + 2, Cin), lambda s: (s, 0, 0, 0)),
            pl.BlockSpec((9 * Cin, Cout_p), lambda s: (0, 0)),   # resident
        ],
        out_specs=(
            pl.BlockSpec((1, R, Cout), lambda s: (s, 0, 0)),
            pl.BlockSpec((1, 1, Cout_p), lambda s: (s, 0, 0)),
            pl.BlockSpec((1, 1, Cout_p), lambda s: (s, 0, 0)),
        ),
        scratch_shapes=[pltpu.VMEM((R, 9 * Cin), compute_dtype)],
        compiler_params=pltpu.CompilerParams(
            dimension_semantics=("parallel",)),
    )(x_bands, w)

    # ---- finalize global BN batch stats -> per-channel scale/shift (f32).
    total = jnp.sum(sums[:, 0, :Cout], axis=0)           # (Cout,)
    total_sq = jnp.sum(sumsq[:, 0, :Cout], axis=0)       # (Cout,)
    mean = total / M
    var = jnp.maximum(total_sq / M - mean * mean, 0.0)   # biased var (BN norm)
    scale = (gamma.astype(jnp.float32) * jax.lax.rsqrt(var + EPS)).reshape(1, Cout)
    shift = (beta.astype(jnp.float32) - mean * scale[0]).reshape(1, Cout)

    # ---- pass 2: pipelined normalize + affine + ReLU over groups of bands.
    G = _pick_band_group(S, R * Cout * 4)
    out = pl.pallas_call(
        _bn_relu_kernel,
        out_shape=jax.ShapeDtypeStruct((S, R, Cout), jnp.float32),
        grid=(S // G,),
        in_specs=[
            pl.BlockSpec((G, R, Cout), lambda i: (i, 0, 0)),
            pl.BlockSpec((1, Cout), lambda i: (0, 0)),           # resident
            pl.BlockSpec((1, Cout), lambda i: (0, 0)),           # resident
        ],
        out_specs=pl.BlockSpec((G, R, Cout), lambda i: (i, 0, 0)),
        compiler_params=pltpu.CompilerParams(
            dimension_semantics=("parallel",)),
    )(y, scale, shift)

    # (S, R, Cout) is row-major (n, band, th, w, c) -> NHWC -> NCHW.
    out = out.reshape(N, H, W, Cout)
    return jnp.transpose(out, (0, 3, 1, 2))


def reference_forward(x_nchw, weight_oihw, gamma, beta):
    """Pure-JAX f32 reference mirroring the PyTorch module (training-mode BN)."""
    x_pad = jnp.pad(x_nchw, ((0, 0), (0, 0), (1, 1), (1, 1)), mode="edge")
    y = jax.lax.conv_general_dilated(
        x_pad, weight_oihw, window_strides=(1, 1), padding="VALID",
        dimension_numbers=("NCHW", "OIHW", "NCHW"))
    mean = jnp.mean(y, axis=(0, 2, 3), keepdims=True)
    var = jnp.mean((y - mean) ** 2, axis=(0, 2, 3), keepdims=True)
    yh = (y - mean) / jnp.sqrt(var + EPS)
    out = yh * gamma.reshape(1, -1, 1, 1) + beta.reshape(1, -1, 1, 1)
    return jnp.maximum(out, 0.0)


if __name__ == "__main__":
    key = jax.random.PRNGKey(0)
    k_x, k_w, k_g, k_b = jax.random.split(key, 4)

    N, Cin, Cout, H, W = 2, 4, 8, 16, 16
    x = jax.random.normal(k_x, (N, Cin, H, W), dtype=jnp.float32)

    # Conv2d weight (kaiming-ish scale, bias=False); non-trivial BN affine.
    fan_in = Cin * 3 * 3
    weight = jax.random.normal(k_w, (Cout, Cin, 3, 3), dtype=jnp.float32) / np.sqrt(fan_in)
    gamma = 1.0 + 0.1 * jax.random.normal(k_g, (Cout,), dtype=jnp.float32)
    beta = 0.1 * jax.random.normal(k_b, (Cout,), dtype=jnp.float32)

    out = jax.block_until_ready(conv_block_forward(x, weight, gamma, beta))
    ref = jax.block_until_ready(reference_forward(x, weight, gamma, beta))

    # Tolerance sized for bf16 MXU inputs + bf16 conv intermediate
    # (f32 accumulation, f32 BN statistics and epilogue).
    np.testing.assert_allclose(np.asarray(out), np.asarray(ref),
                               rtol=2e-2, atol=3e-2)
    print("KERNEL_OK")
</pallas_src>

<mosaic_0001>
module attributes {stable_mosaic.version = 11 : i64} {
  func.func @_conv_stats_kernel(%arg0: i32, %arg1: memref<1x10x18x4xbf16, #tpu.memory_space<vmem>>, %arg2: memref<36x128xbf16, #tpu.memory_space<vmem>>, %arg3: memref<1x128x8xbf16, #tpu.memory_space<vmem>>, %arg4: memref<1x1x128xf32, #tpu.memory_space<vmem>>, %arg5: memref<1x1x128xf32, #tpu.memory_space<vmem>>, %arg6: memref<128x36xbf16, #tpu.memory_space<vmem>>) attributes {dimension_semantics = [#tpu.dimension_semantics<parallel>], iteration_bounds = array<i64: 4>, scalar_prefetch = 0 : i64, scratch_operands = 1 : i64, tpu.core_type = #tpu.core_type<tc>, window_params = [{transform_indices = @transform_0, window_bounds = array<i64: 1, 10, 18, 4>}, {pipeline_mode = #tpu.pipeline_mode<synchronous>, transform_indices = @transform_1, window_bounds = array<i64: 36, 128>}, {transform_indices = @transform_2, window_bounds = array<i64: 1, 128, 8>}, {transform_indices = @transform_3, window_bounds = array<i64: 1, 1, 128>}, {transform_indices = @transform_4, window_bounds = array<i64: 1, 1, 128>}]} {
    %c0 = arith.constant 0 : index
    %c0_0 = arith.constant 0 : index
    %c0_1 = arith.constant 0 : index
    %c0_2 = arith.constant 0 : index
    %0 = vector.load %arg1[%c0, %c0_0, %c0_1, %c0_2] : memref<1x10x18x4xbf16, #tpu.memory_space<vmem>>, vector<1x10x18x4xbf16>
    %1 = vector.shape_cast %0 : vector<1x10x18x4xbf16> to vector<10x18x4xbf16>
    %2 = vector.extract_strided_slice %1 {offsets = [0, 0, 0], sizes = [8, 16, 4], strides = [1, 1, 1]} : vector<10x18x4xbf16> to vector<8x16x4xbf16>
    %3 = vector.shape_cast %2 : vector<8x16x4xbf16> to vector<128x4xbf16>
    %c0_3 = arith.constant 0 : index
    %c0_4 = arith.constant 0 : index
    %4 = vector.load %arg6[%c0_3, %c0_4] : memref<128x36xbf16, #tpu.memory_space<vmem>>, vector<128x4xbf16>
    tpu.vector_store %arg6[%c0_3, %c0_4], %3 {strides = array<i32>} : memref<128x36xbf16, #tpu.memory_space<vmem>>, vector<128x4xbf16>,
    %5 = vector.extract_strided_slice %1 {offsets = [0, 1, 0], sizes = [8, 16, 4], strides = [1, 1, 1]} : vector<10x18x4xbf16> to vector<8x16x4xbf16>
    %6 = vector.shape_cast %5 : vector<8x16x4xbf16> to vector<128x4xbf16>
    %c0_5 = arith.constant 0 : index
    %c4 = arith.constant 4 : index
    %7 = vector.load %arg6[%c0_5, %c4] : memref<128x36xbf16, #tpu.memory_space<vmem>>, vector<128x4xbf16>
    tpu.vector_store %arg6[%c0_5, %c4], %6 {strides = array<i32>} : memref<128x36xbf16, #tpu.memory_space<vmem>>, vector<128x4xbf16>,
    %8 = vector.extract_strided_slice %1 {offsets = [0, 2, 0], sizes = [8, 16, 4], strides = [1, 1, 1]} : vector<10x18x4xbf16> to vector<8x16x4xbf16>
    %9 = vector.shape_cast %8 : vector<8x16x4xbf16> to vector<128x4xbf16>
    %c0_6 = arith.constant 0 : index
    %c8 = arith.constant 8 : index
    %10 = vector.load %arg6[%c0_6, %c8] : memref<128x36xbf16, #tpu.memory_space<vmem>>, vector<128x4xbf16>
    tpu.vector_store %arg6[%c0_6, %c8], %9 {strides = array<i32>} : memref<128x36xbf16, #tpu.memory_space<vmem>>, vector<128x4xbf16>,
    %11 = vector.extract_strided_slice %1 {offsets = [1, 0, 0], sizes = [8, 16, 4], strides = [1, 1, 1]} : vector<10x18x4xbf16> to vector<8x16x4xbf16>
    %12 = vector.shape_cast %11 : vector<8x16x4xbf16> to vector<128x4xbf16>
    %c0_7 = arith.constant 0 : index
    %c12 = arith.constant 12 : index
    %13 = vector.load %arg6[%c0_7, %c12] : memref<128x36xbf16, #tpu.memory_space<vmem>>, vector<128x4xbf16>
    tpu.vector_store %arg6[%c0_7, %c12], %12 {strides = array<i32>} : memref<128x36xbf16, #tpu.memory_space<vmem>>, vector<128x4xbf16>,
    %14 = vector.extract_strided_slice %1 {offsets = [1, 1, 0], sizes = [8, 16, 4], strides = [1, 1, 1]} : vector<10x18x4xbf16> to vector<8x16x4xbf16>
    %15 = vector.shape_cast %14 : vector<8x16x4xbf16> to vector<128x4xbf16>
    %c0_8 = arith.constant 0 : index
    %c16 = arith.constant 16 : index
    %16 = vector.load %arg6[%c0_8, %c16] : memref<128x36xbf16, #tpu.memory_space<vmem>>, vector<128x4xbf16>
    tpu.vector_store %arg6[%c0_8, %c16], %15 {strides = array<i32>} : memref<128x36xbf16, #tpu.memory_space<vmem>>, vector<128x4xbf16>,
    %17 = vector.extract_strided_slice %1 {offsets = [1, 2, 0], sizes = [8, 16, 4], strides = [1, 1, 1]} : vector<10x18x4xbf16> to vector<8x16x4xbf16>
    %18 = vector.shape_cast %17 : vector<8x16x4xbf16> to vector<128x4xbf16>
    %c0_9 = arith.constant 0 : index
    %c20 = arith.constant 20 : index
    %19 = vector.load %arg6[%c0_9, %c20] : memref<128x36xbf16, #tpu.memory_space<vmem>>, vector<128x4xbf16>
    tpu.vector_store %arg6[%c0_9, %c20], %18 {strides = array<i32>} : memref<128x36xbf16, #tpu.memory_space<vmem>>, vector<128x4xbf16>,
    %20 = vector.extract_strided_slice %1 {offsets = [2, 0, 0], sizes = [8, 16, 4], strides = [1, 1, 1]} : vector<10x18x4xbf16> to vector<8x16x4xbf16>
    %21 = vector.shape_cast %20 : vector<8x16x4xbf16> to vector<128x4xbf16>
    %c0_10 = arith.constant 0 : index
    %c24 = arith.constant 24 : index
    %22 = vector.load %arg6[%c0_10, %c24] : memref<128x36xbf16, #tpu.memory_space<vmem>>, vector<128x4xbf16>
    tpu.vector_store %arg6[%c0_10, %c24], %21 {strides = array<i32>} : memref<128x36xbf16, #tpu.memory_space<vmem>>, vector<128x4xbf16>,
    %23 = vector.extract_strided_slice %1 {offsets = [2, 1, 0], sizes = [8, 16, 4], strides = [1, 1, 1]} : vector<10x18x4xbf16> to vector<8x16x4xbf16>
    %24 = vector.shape_cast %23 : vector<8x16x4xbf16> to vector<128x4xbf16>
    %c0_11 = arith.constant 0 : index
    %c28 = arith.constant 28 : index
    %25 = vector.load %arg6[%c0_11, %c28] : memref<128x36xbf16, #tpu.memory_space<vmem>>, vector<128x4xbf16>
    tpu.vector_store %arg6[%c0_11, %c28], %24 {strides = array<i32>} : memref<128x36xbf16, #tpu.memory_space<vmem>>, vector<128x4xbf16>,
    %26 = vector.extract_strided_slice %1 {offsets = [2, 2, 0], sizes = [8, 16, 4], strides = [1, 1, 1]} : vector<10x18x4xbf16> to vector<8x16x4xbf16>
    %27 = vector.shape_cast %26 : vector<8x16x4xbf16> to vector<128x4xbf16>
    %c0_12 = arith.constant 0 : index
    %c32 = arith.constant 32 : index
    %28 = vector.load %arg6[%c0_12, %c32] : memref<128x36xbf16, #tpu.memory_space<vmem>>, vector<128x4xbf16>
    tpu.vector_store %arg6[%c0_12, %c32], %27 {strides = array<i32>} : memref<128x36xbf16, #tpu.memory_space<vmem>>, vector<128x4xbf16>,
    %c0_13 = arith.constant 0 : index
    %c0_14 = arith.constant 0 : index
    %29 = vector.load %arg6[%c0_13, %c0_14] : memref<128x36xbf16, #tpu.memory_space<vmem>>, vector<128x36xbf16>
    %c0_15 = arith.constant 0 : index
    %c0_16 = arith.constant 0 : index
    %30 = vector.load %arg2[%c0_15, %c0_16] : memref<36x128xbf16, #tpu.memory_space<vmem>>, vector<36x128xbf16>
    %cst = arith.constant dense<0.000000e+00> : vector<128x128xf32>
    %31 = tpu.matmul %29, %30, %cst {dimension_numbers = #tpu.dot_dimension_numbers<[1], [0], [0], [1], [0, 0, 1, 1], [], []>} : vector<128x36xbf16>, vector<36x128xbf16>, vector<128x128xf32> -> vector<128x128xf32>
    %32 = vector.extract_strided_slice %31 {offsets = [0, 0], sizes = [128, 8], strides = [1, 1]} : vector<128x128xf32> to vector<128x8xf32>
    %33 = arith.truncf %32 : vector<128x8xf32> to vector<128x8xbf16>
    %c0_17 = arith.constant 0 : index
    %c0_18 = arith.constant 0 : index
    %c0_19 = arith.constant 0 : index
    %34 = vector.load %arg3[%c0_17, %c0_18, %c0_19] : memref<1x128x8xbf16, #tpu.memory_space<vmem>>, vector<1x128x8xbf16>
    %35 = vector.shape_cast %34 : vector<1x128x8xbf16> to vector<128x8xbf16>
    %36 = vector.shape_cast %33 : vector<128x8xbf16> to vector<1x128x8xbf16>
    tpu.vector_store %arg3[%c0_17, %c0_18, %c0_19], %36 {strides = array<i32>} : memref<1x128x8xbf16, #tpu.memory_space<vmem>>, vector<1x128x8xbf16>,
    %cst_20 = arith.constant dense<0.000000e+00> : vector<128xf32>
    %37 = vector.multi_reduction <add>, %31, %cst_20 [0] : vector<128x128xf32> to vector<128xf32>
    %38 = vector.shape_cast %37 : vector<128xf32> to vector<1x128xf32>
    %c0_21 = arith.constant 0 : index
    %c0_22 = arith.constant 0 : index
    %c0_23 = arith.constant 0 : index
    %39 = vector.load %arg4[%c0_21, %c0_22, %c0_23] : memref<1x1x128xf32, #tpu.memory_space<vmem>>, vector<1x1x128xf32>
    %40 = vector.shape_cast %39 : vector<1x1x128xf32> to vector<1x128xf32>
    %41 = vector.shape_cast %38 : vector<1x128xf32> to vector<1x1x128xf32>
    tpu.vector_store %arg4[%c0_21, %c0_22, %c0_23], %41 {strides = array<i32>} : memref<1x1x128xf32, #tpu.memory_space<vmem>>, vector<1x1x128xf32>,
    %42 = arith.mulf %31, %31 : vector<128x128xf32>
    %cst_24 = arith.constant dense<0.000000e+00> : vector<128xf32>
    %43 = vector.multi_reduction <add>, %42, %cst_24 [0] : vector<128x128xf32> to vector<128xf32>
    %44 = vector.shape_cast %43 : vector<128xf32> to vector<1x128xf32>
    %c0_25 = arith.constant 0 : index
    %c0_26 = arith.constant 0 : index
    %c0_27 = arith.constant 0 : index
    %45 = vector.load %arg5[%c0_25, %c0_26, %c0_27] : memref<1x1x128xf32, #tpu.memory_space<vmem>>, vector<1x1x128xf32>
    %46 = vector.shape_cast %45 : vector<1x1x128xf32> to vector<1x128xf32>
    %47 = vector.shape_cast %44 : vector<1x128xf32> to vector<1x1x128xf32>
    tpu.vector_store %arg5[%c0_25, %c0_26, %c0_27], %47 {strides = array<i32>} : memref<1x1x128xf32, #tpu.memory_space<vmem>>, vector<1x1x128xf32>,
    return
  }
  func.func @transform_0(%arg0: i32) -> (i32, i32, i32, i32) {
    %c0_i32 = arith.constant 0 : i32
    %c0_i32_0 = arith.constant 0 : i32
    %c0_i32_1 = arith.constant 0 : i32
    %c0_i32_2 = arith.constant 0 : i32
    return %arg0, %c0_i32, %c0_i32_0, %c0_i32_1 : i32, i32, i32, i32
  }
  func.func @transform_1(%arg0: i32) -> (i32, i32) {
    %c0_i32 = arith.constant 0 : i32
    %c0_i32_0 = arith.constant 0 : i32
    %c0_i32_1 = arith.constant 0 : i32
    return %c0_i32, %c0_i32_0 : i32, i32
  }
  func.func @transform_2(%arg0: i32) -> (i32, i32, i32) {
    %c0_i32 = arith.constant 0 : i32
    %c0_i32_0 = arith.constant 0 : i32
    %c0_i32_1 = arith.constant 0 : i32
    return %arg0, %c0_i32, %c0_i32_0 : i32, i32, i32
  }
  func.func @transform_3(%arg0: i32) -> (i32, i32, i32) {
    %c0_i32 = arith.constant 0 : i32
    %c0_i32_0 = arith.constant 0 : i32
    %c0_i32_1 = arith.constant 0 : i32
    return %arg0, %c0_i32, %c0_i32_0 : i32, i32, i32
  }
  func.func @transform_4(%arg0: i32) -> (i32, i32, i32) {
    %c0_i32 = arith.constant 0 : i32
    %c0_i32_0 = arith.constant 0 : i32
    %c0_i32_1 = arith.constant 0 : i32
    return %arg0, %c0_i32, %c0_i32_0 : i32, i32, i32
  }
}

</mosaic_0001>

<llo_original>
// kernel: tpu_custom_call.1
$region0: #{tpu_custom_call.1}
  #allocation0 [shape = 'u32[]', space=smem, size = 0x4, offset = 0x4, fixed_abs, tag = 'smem constant byte address 0x4 - core index']
  #allocation1 [shape = 'u32[144,128]{1,0:T(1,128)}', space=vmem, size = 0x12000, scoped, tag = 'internal scratch']
  #allocation2 [shape = 'bf16[128,36]{1,0:T(16,128)(2,1)}', space=vmem, size = 0x8000, scoped, tag = 'scratch operand']
  %s0 = inlined_call_operand.vmem [shape: bf16[4,10,18,4], index: 0, kind: input, shape index: {}]
  %s1 = inlined_call_operand.vmem [shape: bf16[36,128], index: 1, kind: input, shape index: {}]
  %s2 = inlined_call_operand.vmem [shape: bf16[4,128,8], index: 2, kind: output, shape index: {0}]
  %s3 = inlined_call_operand.hbm [shape: f32[4,1,128], index: 3, kind: output, shape index: {1}]
  %s4 = inlined_call_operand.hbm [shape: f32[4,1,128], index: 4, kind: output, shape index: {2}]
  %5 = xla_tuple %s2, %s3, %s4
  %s6 = sld [smem:[#allocation0]]
  $region57: #{tpu_custom_call.1} parent=0
    _
  %s8 = ssub.s32 1, %s6
  %s9 = scalar_select 0, %s8, %s6
  $region1: #{tpu_custom_call.1} parent=0
    #allocation3 [shape = 'u8[1024]{0}', space=vmem, size = 0x400, scoped, tag = 'output window, operand 1']
    #allocation4 [shape = 's32[2]{0}', space=sflag, size = 0x8, scoped, tag = 'scoped memory for tpu_custom_call.1']
    #allocation5 [shape = 'u8[1024]{0}', space=vmem, size = 0x400, scoped, tag = 'output window, operand 2']
    #allocation6 [shape = 's32[2]{0}', space=sflag, size = 0x8, scoped, tag = 'scoped memory for tpu_custom_call.1']
    %10 = vsyncpa [#allocation4], 0
    %s11 = scalar_lea.sflag [#allocation4], 1
    %12 = vsyncpa %s11, 0
    %13 = vsyncpa [#allocation6], 0
    %s14 = scalar_lea.sflag [#allocation6], 1
    %15 = vsyncpa %s14, 0
    loop: start=0, step=1, limit=6
    $region2: #{tpu_custom_call.1} parent=1 // loop_pre_header
      _
    $region3: #{tpu_custom_call.1} parent=1 // loop_header
      %s17 = sphi 0, %s21
      %p18 = scmp.ge.s32.totalorder %s17, 6
      %s27 = sphi 0, %s29
      %s30 = sphi 0, %s27
      %s31 = sphi 0, %s30
      %s47 = sphi 0, %s31
      %s51 = sphi 0, %s51
      %s53 = sphi 0, %s51
      %s54 = sphi 0, %s53
      %s68 = sphi 0, %s54
      %s74 = sphi 0, %s76
      %s77 = sphi 0, %s74
      %s78 = sphi 0, %s77
      %s94 = sphi 0, %s78
      %s100 = sphi 0, %s102
      %s103 = sphi 0, %s100
      %s104 = sphi 0, %s103
      %s120 = sphi 0, %s104
      %s126 = sphi 0, %s128
      %s129 = sphi 0, %s126
      %s130 = sphi 0, %s129
      %s146 = sphi 0, %s130
    $region4: #{tpu_custom_call.1} parent=1 // loop_header_branch
      %20 = sbr.rel (%p18) target = $region8
    $region5: #{tpu_custom_call.1} parent=1 // loop_body
      %s22 = ssub.s32 %s17, 1
      %s23 = ssub.s32 %s17, 2
      %s24 = sadd.s32 %s17, 1
      %s25 = ssub.s32 %s17, %s24
      %p26 = scmp.eq.s32.totalorder %s25, 0
      %s28 = sadd.s32 %s27, 1
      %s29 = scalar_select %p26, %s27, %s28
      %p32 = pneg %p26
      %p33 = scmp.eq.s32.totalorder %s17, 3
      %p34 = por %p32, %p33
      %p35 = scmp.ne.s32.totalorder %s27, %s30
      %p36 = scmp.eq.s32.totalorder %s17, 0
      %p37 = por %p35, %p36
      %p38 = scmp.ne.s32.totalorder %s27, %s30
      %p39 = scmp.eq.s32.totalorder %s22, 3
      %p40 = por %p38, %p39
      %p41 = scmp.ne.s32.totalorder %s30, %s31
      %p42 = scmp.eq.s32.totalorder %s22, 0
      %p43 = por %p41, %p42
      %p44 = scmp.ne.s32.totalorder %s30, %s31
      %p45 = scmp.eq.s32.totalorder %s23, 3
      %p46 = por %p44, %p45
      %p48 = scmp.ne.s32.totalorder %s31, %s47
      %p49 = scmp.eq.s32.totalorder %s23, 0
      %p50 = por %p48, %p49
      %s52 = sadd.s32 %s51, 1
      %p55 = scmp.eq.s32.totalorder %s17, 3
      %p56 = scmp.ne.s32.totalorder %s51, %s53
      %p57 = scmp.eq.s32.totalorder %s17, 0
      %p58 = por %p56, %p57
      %p59 = scmp.ne.s32.totalorder %s51, %s53
      %p60 = scmp.eq.s32.totalorder %s22, 3
      %p61 = por %p59, %p60
      %p62 = scmp.ne.s32.totalorder %s53, %s54
      %p63 = scmp.eq.s32.totalorder %s22, 0
      %p64 = por %p62, %p63
      %p65 = scmp.ne.s32.totalorder %s53, %s54
      %p66 = scmp.eq.s32.totalorder %s23, 3
      %p67 = por %p65, %p66
      %p69 = scmp.ne.s32.totalorder %s54, %s68
      %p70 = scmp.eq.s32.totalorder %s23, 0
      %p71 = por %p69, %p70
      %s72 = ssub.s32 %s17, %s24
      %p73 = scmp.eq.s32.totalorder %s72, 0
      %s75 = sadd.s32 %s74, 1
      %s76 = scalar_select %p73, %s74, %s75
      %p79 = pneg %p73
      %p80 = scmp.eq.s32.totalorder %s17, 3
      %p81 = por %p79, %p80
      %p82 = scmp.ne.s32.totalorder %s74, %s77
      %p83 = scmp.eq.s32.totalorder %s17, 0
      %p84 = por %p82, %p83
      %p85 = scmp.ne.s32.totalorder %s74, %s77
      %p86 = scmp.eq.s32.totalorder %s22, 3
      %p87 = por %p85, %p86
      %p88 = scmp.ne.s32.totalorder %s77, %s78
      %p89 = scmp.eq.s32.totalorder %s22, 0
      %p90 = por %p88, %p89
      %p91 = scmp.ne.s32.totalorder %s77, %s78
      %p92 = scmp.eq.s32.totalorder %s23, 3
      %p93 = por %p91, %p92
      %p95 = scmp.ne.s32.totalorder %s78, %s94
      %p96 = scmp.eq.s32.totalorder %s23, 0
      %p97 = por %p95, %p96
      %s98 = ssub.s32 %s17, %s24
      %p99 = scmp.eq.s32.totalorder %s98, 0
      %s101 = sadd.s32 %s100, 1
      %s102 = scalar_select %p99, %s100, %s101
      %p105 = pneg %p99
      %p106 = scmp.eq.s32.totalorder %s17, 3
      %p107 = por %p105, %p106
      %p108 = scmp.ne.s32.totalorder %s100, %s103
      %p109 = scmp.eq.s32.totalorder %s17, 0
      %p110 = por %p108, %p109
      %p111 = scmp.ne.s32.totalorder %s100, %s103
      %p112 = scmp.eq.s32.totalorder %s22, 3
      %p113 = por %p111, %p112
      %p114 = scmp.ne.s32.totalorder %s103, %s104
      %p115 = scmp.eq.s32.totalorder %s22, 0
      %p116 = por %p114, %p115
      %p117 = scmp.ne.s32.totalorder %s103, %s104
      %p118 = scmp.eq.s32.totalorder %s23, 3
      %p119 = por %p117, %p118
      %p121 = scmp.ne.s32.totalorder %s104, %s120
      %p122 = scmp.eq.s32.totalorder %s23, 0
      %p123 = por %p121, %p122
      %s124 = ssub.s32 %s17, %s24
      %p125 = scmp.eq.s32.totalorder %s124, 0
      %s127 = sadd.s32 %s126, 1
      %s128 = scalar_select %p125, %s126, %s127
      %p131 = pneg %p125
      %p132 = scmp.eq.s32.totalorder %s17, 3
      %p133 = por %p131, %p132
      %p134 = scmp.ne.s32.totalorder %s126, %s129
      %p135 = scmp.eq.s32.totalorder %s17, 0
      %p136 = por %p134, %p135
      %p137 = scmp.ne.s32.totalorder %s126, %s129
      %p138 = scmp.eq.s32.totalorder %s22, 3
      %p139 = por %p137, %p138
      %p140 = scmp.ne.s32.totalorder %s129, %s130
      %p141 = scmp.eq.s32.totalorder %s22, 0
      %p142 = por %p140, %p141
      %p143 = scmp.ne.s32.totalorder %s129, %s130
      %p144 = scmp.eq.s32.totalorder %s23, 3
      %p145 = por %p143, %p144
      %p147 = scmp.ne.s32.totalorder %s130, %s146
      %p148 = scmp.eq.s32.totalorder %s23, 0
      %p149 = por %p147, %p148
      %p150 = scmp.le.s32.totalorder 1, %s17
      %p151 = scmp.lt.s32.totalorder %s17, 5
      %p152 = pnand %p150, %p151
      %p153 = pneg %p152
      // Predicated region
      $region9: #{tpu_custom_call.1} parent=5 // pred_check
        _
      $region10: #{tpu_custom_call.1} parent=5 // pred_check_branch
        %155 = sbr.rel (%p152) target = $region12
      $region11: #{tpu_custom_call.1} parent=5 // pred_region
        %s156 = ssub.s32 %s17, 1
        // Predicated region
        $region13: #{tpu_custom_call.1} parent=11 // pred_check
          %p157 = pneg %p64
        $region14: #{tpu_custom_call.1} parent=11 // pred_check_branch
          %159 = sbr.rel (%p157) target = $region16
        $region15: #{tpu_custom_call.1} parent=11 // pred_region
          _
        $region16: #{tpu_custom_call.1} parent=11 // pred_fallthru
          _
      $region12: #{tpu_custom_call.1} parent=5 // pred_fallthru
        _
      %p160 = scmp.lt.s32.totalorder %s17, 4
      // Predicated region
      $region17: #{tpu_custom_call.1} parent=5 // pred_check
        %p161 = pneg %p160
      $region18: #{tpu_custom_call.1} parent=5 // pred_check_branch
        %163 = sbr.rel (%p161) target = $region20
      $region19: #{tpu_custom_call.1} parent=5 // pred_region
        // Predicated region
        $region21: #{tpu_custom_call.1} parent=19 // pred_check
          %p164 = pneg %p37
        $region22: #{tpu_custom_call.1} parent=19 // pred_check_branch
          %166 = sbr.rel (%p164) target = $region24
        $region23: #{tpu_custom_call.1} parent=19 // pred_region
          %p167 = scmp.lt.s32.totalorder %s17, 3
          %s168 = scalar_select %p167, %s17, 3
          %s169 = smul.addr %s168, 30
          %s170 = smul.addr %s169, 4
          %s171 = scalar_lea.vmem %s0, %s170
        $region24: #{tpu_custom_call.1} parent=19 // pred_fallthru
          _
      $region20: #{tpu_custom_call.1} parent=5 // pred_fallthru
        _
      %p172 = scmp.le.s32.totalorder 1, %s17
      %p173 = scmp.lt.s32.totalorder %s17, 5
      %p174 = pnand %p172, %p173
      %p175 = pneg %p174
      // Predicated region
      $region25: #{tpu_custom_call.1} parent=5 // pred_check
        _
      $region26: #{tpu_custom_call.1} parent=5 // pred_check_branch
        %177 = sbr.rel (%p174) target = $region28
      $region27: #{tpu_custom_call.1} parent=5 // pred_region
        %s178 = ssub.s32 %s17, 1
        %p179 = scmp.lt.s32.totalorder %s22, 3
        %s180 = scalar_select %p179, %s22, 3
        %s181 = smul.addr %s180, 30
        %s182 = smul.addr %s181, 4
        %s183 = scalar_lea.vmem %s0, %s182
        %p184 = pneg %p43
        %p185 = pneg %p40
        %p186 = pneg %p64
        %p187 = pneg %p61
        %p188 = pneg %p90
        %p189 = pneg %p87
        %p190 = scmp.lt.s32.totalorder %s22, 3
        %s191 = scalar_select %p190, %s22, 3
        %s192 = smul.addr %s191, 16
        %s193 = smul.addr %s192, 4
        %s194 = scalar_lea.vmem %s2, %s193
        %p195 = pneg %p116
        %p196 = pneg %p113
        %s197 = sand.u32 %s103, 1
        %s198 = scalar_lea.sflag [#allocation4], %s197
        %s199 = sand.u32 %s103, 1
        %s200 = scalar_lea.vmem [#allocation3], %s199
        %p201 = pneg %p142
        %p202 = pneg %p139
        %s203 = sand.u32 %s129, 1
        %s204 = scalar_lea.sflag [#allocation6], %s203
        %s205 = sand.u32 %s129, 1
        %s206 = scalar_lea.vmem [#allocation5], %s205
        %p207 = scmp.lt.s32.totalorder %s22, 3
        %s208 = scalar_select %p207, %s22, 3
        %s209 = smul.addr %s208, 30
        %s210 = smul.addr %s209, 4
        %s211 = scalar_lea.vmem %s0, %s210
        %p212 = scmp.lt.s32.totalorder %s22, 3
        %s213 = scalar_select %p212, %s22, 3
        %s214 = smul.addr %s213, 16
        %s215 = smul.addr %s214, 4
        %s216 = scalar_lea.vmem %s2, %s215
        %v218 = vld [vmem:[%s211] sm:$0xf]
        %v219 = vld [vmem:[%s211 + $0x4] sm:$0xf]
        %v220 = vld [vmem:[%s211 + $0x8] sm:$0x1]
        %v221 = vld [vmem:[%s211 + $0xc] sm:$0xf]
        %v222 = vld [vmem:[%s211 + $0x10] sm:$0xf]
        %v223 = vld [vmem:[%s211 + $0x14] sm:$0x1]
        %v224 = vld [vmem:[%s211 + $0x18] sm:$0xf]
        %v225 = vld [vmem:[%s211 + $0x1c] sm:$0xf]
        %v226 = vld [vmem:[%s211 + $0x20] sm:$0x1]
        %v227 = vld [vmem:[%s211 + $0x24] sm:$0xf]
        %v228 = vld [vmem:[%s211 + $0x28] sm:$0xf]
        %v229 = vld [vmem:[%s211 + $0x2c] sm:$0x1]
        %v230 = vld [vmem:[%s211 + $0x30] sm:$0xf]
        %v231 = vld [vmem:[%s211 + $0x34] sm:$0xf]
        %v232 = vld [vmem:[%s211 + $0x38] sm:$0x1]
        %v233 = vld [vmem:[%s211 + $0x3c] sm:$0xf]
        %v234 = vld [vmem:[%s211 + $0x40] sm:$0xf]
        %v235 = vld [vmem:[%s211 + $0x44] sm:$0x1]
        %v236 = vld [vmem:[%s211 + $0x48] sm:$0xf]
        %v237 = vld [vmem:[%s211 + $0x4c] sm:$0xf]
        %v238 = vld [vmem:[%s211 + $0x50] sm:$0x1]
        %v239 = vld [vmem:[%s211 + $0x54] sm:$0xf]
        %v240 = vld [vmem:[%s211 + $0x58] sm:$0xf]
        %v241 = vld [vmem:[%s211 + $0x5c] sm:$0x1]
        %v242 = vld [vmem:[%s211 + $0x60] sm:$0xf]
        %v243 = vld [vmem:[%s211 + $0x64] sm:$0xf]
        %v244 = vld [vmem:[%s211 + $0x68] sm:$0x1]
        %v245 = vld [vmem:[%s211 + $0x6c] sm:$0xf]
        %v246 = vld [vmem:[%s211 + $0x70] sm:$0xf]
        %v247 = vld [vmem:[%s211 + $0x74] sm:$0x1]
        %v264 = vunpack.c.l.b16 %v218
        %v265 = vunpack.c.l.b16 %v219
        %v266 = vunpack.c.l.b16 %v221
        %v267 = vunpack.c.l.b16 %v222
        %v268 = vunpack.c.l.b16 %v224
        %v269 = vunpack.c.l.b16 %v225
        %v270 = vunpack.c.l.b16 %v227
        %v271 = vunpack.c.l.b16 %v228
        %v272 = vunpack.c.l.b16 %v230
        %v273 = vunpack.c.l.b16 %v231
        %v274 = vunpack.c.l.b16 %v233
        %v275 = vunpack.c.l.b16 %v234
        %v276 = vunpack.c.l.b16 %v236
        %v277 = vunpack.c.l.b16 %v237
        %v278 = vunpack.c.l.b16 %v239
        %v279 = vunpack.c.l.b16 %v240
        %v280 = vpack.c.b16 %v265, %v264
        %v281 = vpack.c.b16 %v267, %v266
        %v282 = vpack.c.b16 %v269, %v268
        %v283 = vpack.c.b16 %v271, %v270
        %v284 = vpack.c.b16 %v273, %v272
        %v285 = vpack.c.b16 %v275, %v274
        %v286 = vpack.c.b16 %v277, %v276
        %v287 = vpack.c.b16 %v279, %v278
        %vm296 = vcmask 31744
        %297 = vst.msk [vmem:[#allocation2] sm:$0xff] %vm296, %v280
        %298 = vst.msk [vmem:[#allocation2 + $0x8] sm:$0xff] %vm296, %v281
        %299 = vst.msk [vmem:[#allocation2 + $0x10] sm:$0xff] %vm296, %v282
        %300 = vst.msk [vmem:[#allocation2 + $0x18] sm:$0xff] %vm296, %v283
        %301 = vst.msk [vmem:[#allocation2 + $0x20] sm:$0xff] %vm296, %v284
        %302 = vst.msk [vmem:[#allocation2 + $0x28] sm:$0xff] %vm296, %v285
        %303 = vst.msk [vmem:[#allocation2 + $0x30] sm:$0xff] %vm296, %v286
        %304 = vst.msk [vmem:[#allocation2 + $0x38] sm:$0xff] %vm296, %v287
        %vm305 = vsmask.f32 3328
        %vm306 = vsmask.f32 7440
        %vm307 = vmor %vm305, %vm306
        %v309 = vshrl.u32 %v218, 16
        %v311 = vrot.slane %v309, 4
        %v312 = vshll.u32 %v218, 16
        %v314 = vrot.slane %v312, 5
        %v315 = vor.u32 %v311, %v314
        %v316 = vrot.slane %v315, 4
        %v318 = vshll.u32 %v219, 16
        %v320 = vrot.slane %v318, 5
        %v321 = vsel %vm307, %v316, %v320
        %v322 = vshrl.u32 %v219, 16
        %v324 = vrot.slane %v322, 4
        %v325 = vor.u32 %v324, %v320
        %v326 = vrot.slane %v325, 4
        %v328 = vshll.u32 %v220, 16
        %v330 = vrot.slane %v328, 5
        %v331 = vsel %vm307, %v326, %v330
        %v333 = vshrl.u32 %v221, 16
        %v335 = vrot.slane %v333, 4
        %v336 = vshll.u32 %v221, 16
        %v338 = vrot.slane %v336, 5
        %v339 = vor.u32 %v335, %v338
        %v340 = vrot.slane %v339, 4
        %v342 = vshll.u32 %v222, 16
        %v344 = vrot.slane %v342, 5
        %v345 = vsel %vm307, %v340, %v344
        %v346 = vshrl.u32 %v222, 16
        %v348 = vrot.slane %v346, 4
        %v349 = vor.u32 %v348, %v344
        %v350 = vrot.slane %v349, 4
        %v352 = vshll.u32 %v223, 16
        %v354 = vrot.slane %v352, 5
        %v355 = vsel %vm307, %v350, %v354
        %v357 = vshrl.u32 %v224, 16
        %v359 = vrot.slane %v357, 4
        %v360 = vshll.u32 %v224, 16
        %v362 = vrot.slane %v360, 5
        %v363 = vor.u32 %v359, %v362
        %v364 = vrot.slane %v363, 4
        %v366 = vshll.u32 %v225, 16
        %v368 = vrot.slane %v366, 5
        %v369 = vsel %vm307, %v364, %v368
        %v370 = vshrl.u32 %v225, 16
        %v372 = vrot.slane %v370, 4
        %v373 = vor.u32 %v372, %v368
        %v374 = vrot.slane %v373, 4
        %v376 = vshll.u32 %v226, 16
        %v378 = vrot.slane %v376, 5
        %v379 = vsel %vm307, %v374, %v378
        %v381 = vshrl.u32 %v227, 16
        %v383 = vrot.slane %v381, 4
        %v384 = vshll.u32 %v227, 16
        %v386 = vrot.slane %v384, 5
        %v387 = vor.u32 %v383, %v386
        %v388 = vrot.slane %v387, 4
        %v390 = vshll.u32 %v228, 16
        %v392 = vrot.slane %v390, 5
        %v393 = vsel %vm307, %v388, %v392
        %v394 = vshrl.u32 %v228, 16
        %v396 = vrot.slane %v394, 4
        %v397 = vor.u32 %v396, %v392
        %v398 = vrot.slane %v397, 4
        %v400 = vshll.u32 %v229, 16
        %v402 = vrot.slane %v400, 5
        %v403 = vsel %vm307, %v398, %v402
        %v405 = vshrl.u32 %v230, 16
        %v407 = vrot.slane %v405, 4
        %v408 = vshll.u32 %v230, 16
        %v410 = vrot.slane %v408, 5
        %v411 = vor.u32 %v407, %v410
        %v412 = vrot.slane %v411, 4
        %v414 = vshll.u32 %v231, 16
        %v416 = vrot.slane %v414, 5
        %v417 = vsel %vm307, %v412, %v416
        %v418 = vshrl.u32 %v231, 16
        %v420 = vrot.slane %v418, 4
        %v421 = vor.u32 %v420, %v416
        %v422 = vrot.slane %v421, 4
        %v424 = vshll.u32 %v232, 16
        %v426 = vrot.slane %v424, 5
        %v427 = vsel %vm307, %v422, %v426
        %v429 = vshrl.u32 %v233, 16
        %v431 = vrot.slane %v429, 4
        %v432 = vshll.u32 %v233, 16
        %v434 = vrot.slane %v432, 5
        %v435 = vor.u32 %v431, %v434
        %v436 = vrot.slane %v435, 4
        %v438 = vshll.u32 %v234, 16
        %v440 = vrot.slane %v438, 5
        %v441 = vsel %vm307, %v436, %v440
        %v442 = vshrl.u32 %v234, 16
        %v444 = vrot.slane %v442, 4
        %v445 = vor.u32 %v444, %v440
        %v446 = vrot.slane %v445, 4
        %v448 = vshll.u32 %v235, 16
        %v450 = vrot.slane %v448, 5
        %v451 = vsel %vm307, %v446, %v450
        %v453 = vshrl.u32 %v236, 16
        %v455 = vrot.slane %v453, 4
        %v456 = vshll.u32 %v236, 16
        %v458 = vrot.slane %v456, 5
        %v459 = vor.u32 %v455, %v458
        %v460 = vrot.slane %v459, 4
        %v462 = vshll.u32 %v237, 16
        %v464 = vrot.slane %v462, 5
        %v465 = vsel %vm307, %v460, %v464
        %v466 = vshrl.u32 %v237, 16
        %v468 = vrot.slane %v466, 4
        %v469 = vor.u32 %v468, %v464
        %v470 = vrot.slane %v469, 4
        %v472 = vshll.u32 %v238, 16
        %v474 = vrot.slane %v472, 5
        %v475 = vsel %vm307, %v470, %v474
        %v477 = vshrl.u32 %v239, 16
        %v479 = vrot.slane %v477, 4
        %v480 = vshll.u32 %v239, 16
        %v482 = vrot.slane %v480, 5
        %v483 = vor.u32 %v479, %v482
        %v484 = vrot.slane %v483, 4
        %v486 = vshll.u32 %v240, 16
        %v488 = vrot.slane %v486, 5
        %v489 = vsel %vm307, %v484, %v488
        %v490 = vshrl.u32 %v240, 16
        %v492 = vrot.slane %v490, 4
        %v493 = vor.u32 %v492, %v488
        %v494 = vrot.slane %v493, 4
        %v496 = vshll.u32 %v241, 16
        %v498 = vrot.slane %v496, 5
        %v499 = vsel %vm307, %v494, %v498
        %v500 = vunpack.c.l.b16 %v321
        %v501 = vunpack.c.l.b16 %v331
        %v502 = vunpack.c.l.b16 %v345
        %v503 = vunpack.c.l.b16 %v355
        %v504 = vunpack.c.l.b16 %v369
        %v505 = vunpack.c.l.b16 %v379
        %v506 = vunpack.c.l.b16 %v393
        %v507 = vunpack.c.l.b16 %v403
        %v508 = vunpack.c.l.b16 %v417
        %v509 = vunpack.c.l.b16 %v427
        %v510 = vunpack.c.l.b16 %v441
        %v511 = vunpack.c.l.b16 %v451
        %v512 = vunpack.c.l.b16 %v465
        %v513 = vunpack.c.l.b16 %v475
        %v514 = vunpack.c.l.b16 %v489
        %v515 = vunpack.c.l.b16 %v499
        %v516 = vpack.c.b16 %v501, %v500
        %v517 = vpack.c.b16 %v503, %v502
        %v518 = vpack.c.b16 %v505, %v504
        %v519 = vpack.c.b16 %v507, %v506
        %v520 = vpack.c.b16 %v509, %v508
        %v521 = vpack.c.b16 %v511, %v510
        %v522 = vpack.c.b16 %v513, %v512
        %v523 = vpack.c.b16 %v515, %v514
        %524 = vrot.lane.b32.xlu0 %v516, 4
        %v525 = vpop.permute.xlu0 %524
        %526 = vrot.lane.b32.xlu0 %v517, 4
        %v527 = vpop.permute.xlu0 %526
        %528 = vrot.lane.b32.xlu0 %v518, 4
        %v529 = vpop.permute.xlu0 %528
        %530 = vrot.lane.b32.xlu0 %v519, 4
        %v531 = vpop.permute.xlu0 %530
        %532 = vrot.lane.b32.xlu0 %v520, 4
        %v533 = vpop.permute.xlu0 %532
        %534 = vrot.lane.b32.xlu0 %v521, 4
        %v535 = vpop.permute.xlu0 %534
        %536 = vrot.lane.b32.xlu0 %v522, 4
        %v537 = vpop.permute.xlu0 %536
        %538 = vrot.lane.b32.xlu0 %v523, 4
        %v539 = vpop.permute.xlu0 %538
        %vm548 = vcmask 64544
        %549 = vst.msk [vmem:[#allocation2] sm:$0xff] %vm548, %v525
        %550 = vst.msk [vmem:[#allocation2 + $0x8] sm:$0xff] %vm548, %v527
        %551 = vst.msk [vmem:[#allocation2 + $0x10] sm:$0xff] %vm548, %v529
        %552 = vst.msk [vmem:[#allocation2 + $0x18] sm:$0xff] %vm548, %v531
        %553 = vst.msk [vmem:[#allocation2 + $0x20] sm:$0xff] %vm548, %v533
        %554 = vst.msk [vmem:[#allocation2 + $0x28] sm:$0xff] %vm548, %v535
        %555 = vst.msk [vmem:[#allocation2 + $0x30] sm:$0xff] %vm548, %v537
        %556 = vst.msk [vmem:[#allocation2 + $0x38] sm:$0xff] %vm548, %v539
        %vm565 = vcmask 1042432
        %vm566 = vcmask 1046532
        %vm567 = vmor %vm565, %vm566
        %v568 = vrot.slane %v218, 5
        %v569 = vrot.slane %v568, 4
        %v570 = vrot.slane %v219, 5
        %v571 = vsel %vm567, %v569, %v570
        %v572 = vrot.slane %v570, 4
        %v573 = vrot.slane %v220, 5
        %v574 = vsel %vm567, %v572, %v573
        %v575 = vrot.slane %v221, 5
        %v576 = vrot.slane %v575, 4
        %v577 = vrot.slane %v222, 5
        %v578 = vsel %vm567, %v576, %v577
        %v579 = vrot.slane %v577, 4
        %v580 = vrot.slane %v223, 5
        %v581 = vsel %vm567, %v579, %v580
        %v582 = vrot.slane %v224, 5
        %v583 = vrot.slane %v582, 4
        %v584 = vrot.slane %v225, 5
        %v585 = vsel %vm567, %v583, %v584
        %v586 = vrot.slane %v584, 4
        %v587 = vrot.slane %v226, 5
        %v588 = vsel %vm567, %v586, %v587
        %v589 = vrot.slane %v227, 5
        %v590 = vrot.slane %v589, 4
        %v591 = vrot.slane %v228, 5
        %v592 = vsel %vm567, %v590, %v591
        %v593 = vrot.slane %v591, 4
        %v594 = vrot.slane %v229, 5
        %v595 = vsel %vm567, %v593, %v594
        %v596 = vrot.slane %v230, 5
        %v597 = vrot.slane %v596, 4
        %v598 = vrot.slane %v231, 5
        %v599 = vsel %vm567, %v597, %v598
        %v600 = vrot.slane %v598, 4
        %v601 = vrot.slane %v232, 5
        %v602 = vsel %vm567, %v600, %v601
        %v603 = vrot.slane %v233, 5
        %v604 = vrot.slane %v603, 4
        %v605 = vrot.slane %v234, 5
        %v606 = vsel %vm567, %v604, %v605
        %v607 = vrot.slane %v605, 4
        %v608 = vrot.slane %v235, 5
        %v609 = vsel %vm567, %v607, %v608
        %v610 = vrot.slane %v236, 5
        %v611 = vrot.slane %v610, 4
        %v612 = vrot.slane %v237, 5
        %v613 = vsel %vm567, %v611, %v612
        %v614 = vrot.slane %v612, 4
        %v615 = vrot.slane %v238, 5
        %v616 = vsel %vm567, %v614, %v615
        %v617 = vrot.slane %v239, 5
        %v618 = vrot.slane %v617, 4
        %v619 = vrot.slane %v240, 5
        %v620 = vsel %vm567, %v618, %v619
        %v621 = vrot.slane %v619, 4
        %v622 = vrot.slane %v241, 5
        %v623 = vsel %vm567, %v621, %v622
        %v624 = vunpack.c.l.b16 %v571
        %v625 = vunpack.c.l.b16 %v574
        %v626 = vunpack.c.l.b16 %v578
        %v627 = vunpack.c.l.b16 %v581
        %v628 = vunpack.c.l.b16 %v585
        %v629 = vunpack.c.l.b16 %v588
        %v630 = vunpack.c.l.b16 %v592
        %v631 = vunpack.c.l.b16 %v595
        %v632 = vunpack.c.l.b16 %v599
        %v633 = vunpack.c.l.b16 %v602
        %v634 = vunpack.c.l.b16 %v606
        %v635 = vunpack.c.l.b16 %v609
        %v636 = vunpack.c.l.b16 %v613
        %v637 = vunpack.c.l.b16 %v616
        %v638 = vunpack.c.l.b16 %v620
        %v639 = vunpack.c.l.b16 %v623
        %v640 = vpack.c.b16 %v625, %v624
        %v641 = vpack.c.b16 %v627, %v626
        %v642 = vpack.c.b16 %v629, %v628
        %v643 = vpack.c.b16 %v631, %v630
        %v644 = vpack.c.b16 %v633, %v632
        %v645 = vpack.c.b16 %v635, %v634
        %v646 = vpack.c.b16 %v637, %v636
        %v647 = vpack.c.b16 %v639, %v638
        %648 = vrot.lane.b32.xlu0 %v640, 8
        %v649 = vpop.permute.xlu0 %648
        %650 = vrot.lane.b32.xlu0 %v641, 8
        %v651 = vpop.permute.xlu0 %650
        %652 = vrot.lane.b32.xlu0 %v642, 8
        %v653 = vpop.permute.xlu0 %652
        %654 = vrot.lane.b32.xlu0 %v643, 8
        %v655 = vpop.permute.xlu0 %654
        %656 = vrot.lane.b32.xlu0 %v644, 8
        %v657 = vpop.permute.xlu0 %656
        %658 = vrot.lane.b32.xlu0 %v645, 8
        %v659 = vpop.permute.xlu0 %658
        %660 = vrot.lane.b32.xlu0 %v646, 8
        %v661 = vpop.permute.xlu0 %660
        %662 = vrot.lane.b32.xlu0 %v647, 8
        %v663 = vpop.permute.xlu0 %662
        %vm672 = vcmask 97344
        %673 = vst.msk [vmem:[#allocation2] sm:$0xff] %vm672, %v649
        %674 = vst.msk [vmem:[#allocation2 + $0x8] sm:$0xff] %vm672, %v651
        %675 = vst.msk [vmem:[#allocation2 + $0x10] sm:$0xff] %vm672, %v653
        %676 = vst.msk [vmem:[#allocation2 + $0x18] sm:$0xff] %vm672, %v655
        %677 = vst.msk [vmem:[#allocation2 + $0x20] sm:$0xff] %vm672, %v657
        %678 = vst.msk [vmem:[#allocation2 + $0x28] sm:$0xff] %vm672, %v659
        %679 = vst.msk [vmem:[#allocation2 + $0x30] sm:$0xff] %vm672, %v661
        %680 = vst.msk [vmem:[#allocation2 + $0x38] sm:$0xff] %vm672, %v663
        %v683 = vunpack.c.l.b16 %v242
        %v684 = vunpack.c.l.b16 %v243
        %v685 = vpack.c.b16 %v684, %v683
        %686 = vrot.lane.b32.xlu0 %v281, 12
        %v687 = vpop.permute.xlu0 %686
        %688 = vrot.lane.b32.xlu0 %v282, 12
        %v689 = vpop.permute.xlu0 %688
        %690 = vrot.lane.b32.xlu0 %v283, 12
        %v691 = vpop.permute.xlu0 %690
        %692 = vrot.lane.b32.xlu0 %v284, 12
        %v693 = vpop.permute.xlu0 %692
        %694 = vrot.lane.b32.xlu0 %v285, 12
        %v695 = vpop.permute.xlu0 %694
        %696 = vrot.lane.b32.xlu0 %v286, 12
        %v697 = vpop.permute.xlu0 %696
        %698 = vrot.lane.b32.xlu0 %v287, 12
        %v699 = vpop.permute.xlu0 %698
        %700 = vrot.lane.b32.xlu0 %v685, 12
        %v701 = vpop.permute.xlu0 %700
        %vm710 = vcmask 130144
        %711 = vst.msk [vmem:[#allocation2] sm:$0xff] %vm710, %v687
        %712 = vst.msk [vmem:[#allocation2 + $0x8] sm:$0xff] %vm710, %v689
        %713 = vst.msk [vmem:[#allocation2 + $0x10] sm:$0xff] %vm710, %v691
        %714 = vst.msk [vmem:[#allocation2 + $0x18] sm:$0xff] %vm710, %v693
        %715 = vst.msk [vmem:[#allocation2 + $0x20] sm:$0xff] %vm710, %v695
        %716 = vst.msk [vmem:[#allocation2 + $0x28] sm:$0xff] %vm710, %v697
        %717 = vst.msk [vmem:[#allocation2 + $0x30] sm:$0xff] %vm710, %v699
        %718 = vst.msk [vmem:[#allocation2 + $0x38] sm:$0xff] %vm710, %v701
        %v720 = vshrl.u32 %v242, 16
        %v722 = vrot.slane %v720, 4
        %v723 = vshll.u32 %v242, 16
        %v725 = vrot.slane %v723, 5
        %v726 = vor.u32 %v722, %v725
        %v727 = vrot.slane %v726, 4
        %v729 = vshll.u32 %v243, 16
        %v731 = vrot.slane %v729, 5
        %v732 = vsel %vm307, %v727, %v731
        %v733 = vshrl.u32 %v243, 16
        %v735 = vrot.slane %v733, 4
        %v736 = vor.u32 %v735, %v731
        %v737 = vrot.slane %v736, 4
        %v739 = vshll.u32 %v244, 16
        %v741 = vrot.slane %v739, 5
        %v742 = vsel %vm307, %v737, %v741
        %v743 = vunpack.c.l.b16 %v732
        %v744 = vunpack.c.l.b16 %v742
        %v745 = vpack.c.b16 %v744, %v743
        %746 = vrot.lane.b32.xlu0 %v517, 16
        %v747 = vpop.permute.xlu0 %746
        %748 = vrot.lane.b32.xlu0 %v518, 16
        %v749 = vpop.permute.xlu0 %748
        %750 = vrot.lane.b32.xlu0 %v519, 16
        %v751 = vpop.permute.xlu0 %750
        %752 = vrot.lane.b32.xlu0 %v520, 16
        %v753 = vpop.permute.xlu0 %752
        %754 = vrot.lane.b32.xlu0 %v521, 16
        %v755 = vpop.permute.xlu0 %754
        %756 = vrot.lane.b32.xlu0 %v522, 16
        %v757 = vpop.permute.xlu0 %756
        %758 = vrot.lane.b32.xlu0 %v523, 16
        %v759 = vpop.permute.xlu0 %758
        %760 = vrot.lane.b32.xlu0 %v745, 16
        %v761 = vpop.permute.xlu0 %760
        %vm770 = vcmask 162944
        %771 = vst.msk [vmem:[#allocation2] sm:$0xff] %vm770, %v747
        %772 = vst.msk [vmem:[#allocation2 + $0x8] sm:$0xff] %vm770, %v749
        %773 = vst.msk [vmem:[#allocation2 + $0x10] sm:$0xff] %vm770, %v751
        %774 = vst.msk [vmem:[#allocation2 + $0x18] sm:$0xff] %vm770, %v753
        %775 = vst.msk [vmem:[#allocation2 + $0x20] sm:$0xff] %vm770, %v755
        %776 = vst.msk [vmem:[#allocation2 + $0x28] sm:$0xff] %vm770, %v757
        %777 = vst.msk [vmem:[#allocation2 + $0x30] sm:$0xff] %vm770, %v759
        %778 = vst.msk [vmem:[#allocation2 + $0x38] sm:$0xff] %vm770, %v761
        %v780 = vrot.slane %v242, 5
        %v781 = vrot.slane %v780, 4
        %v782 = vrot.slane %v243, 5
        %v783 = vsel %vm567, %v781, %v782
        %v784 = vrot.slane %v782, 4
        %v785 = vrot.slane %v244, 5
        %v786 = vsel %vm567, %v784, %v785
        %v787 = vunpack.c.l.b16 %v783
        %v788 = vunpack.c.l.b16 %v786
        %v789 = vpack.c.b16 %v788, %v787
        %790 = vrot.lane.b32.xlu0 %v641, 20
        %v791 = vpop.permute.xlu0 %790
        %792 = vrot.lane.b32.xlu0 %v642, 20
        %v793 = vpop.permute.xlu0 %792
        %794 = vrot.lane.b32.xlu0 %v643, 20
        %v795 = vpop.permute.xlu0 %794
        %796 = vrot.lane.b32.xlu0 %v644, 20
        %v797 = vpop.permute.xlu0 %796
        %798 = vrot.lane.b32.xlu0 %v645, 20
        %v799 = vpop.permute.xlu0 %798
        %800 = vrot.lane.b32.xlu0 %v646, 20
        %v801 = vpop.permute.xlu0 %800
        %802 = vrot.lane.b32.xlu0 %v647, 20
        %v803 = vpop.permute.xlu0 %802
        %804 = vrot.lane.b32.xlu0 %v789, 20
        %v805 = vpop.permute.xlu0 %804
        %vm814 = vcmask 195744
        %815 = vst.msk [vmem:[#allocation2] sm:$0xff] %vm814, %v791
        %816 = vst.msk [vmem:[#allocation2 + $0x8] sm:$0xff] %vm814, %v793
        %817 = vst.msk [vmem:[#allocation2 + $0x10] sm:$0xff] %vm814, %v795
        %818 = vst.msk [vmem:[#allocation2 + $0x18] sm:$0xff] %vm814, %v797
        %819 = vst.msk [vmem:[#allocation2 + $0x20] sm:$0xff] %vm814, %v799
        %820 = vst.msk [vmem:[#allocation2 + $0x28] sm:$0xff] %vm814, %v801
        %821 = vst.msk [vmem:[#allocation2 + $0x30] sm:$0xff] %vm814, %v803
        %822 = vst.msk [vmem:[#allocation2 + $0x38] sm:$0xff] %vm814, %v805
        %v825 = vunpack.c.l.b16 %v245
        %v826 = vunpack.c.l.b16 %v246
        %v827 = vpack.c.b16 %v826, %v825
        %828 = vrot.lane.b32.xlu0 %v282, 24
        %v829 = vpop.permute.xlu0 %828
        %830 = vrot.lane.b32.xlu0 %v283, 24
        %v831 = vpop.permute.xlu0 %830
        %832 = vrot.lane.b32.xlu0 %v284, 24
        %v833 = vpop.permute.xlu0 %832
        %834 = vrot.lane.b32.xlu0 %v285, 24
        %v835 = vpop.permute.xlu0 %834
        %836 = vrot.lane.b32.xlu0 %v286, 24
        %v837 = vpop.permute.xlu0 %836
        %838 = vrot.lane.b32.xlu0 %v287, 24
        %v839 = vpop.permute.xlu0 %838
        %840 = vrot.lane.b32.xlu0 %v685, 24
        %v841 = vpop.permute.xlu0 %840
        %842 = vrot.lane.b32.xlu0 %v827, 24
        %v843 = vpop.permute.xlu0 %842
        %vm852 = vcmask 228544
        %853 = vst.msk [vmem:[#allocation2] sm:$0xff] %vm852, %v829
        %854 = vst.msk [vmem:[#allocation2 + $0x8] sm:$0xff] %vm852, %v831
        %855 = vst.msk [vmem:[#allocation2 + $0x10] sm:$0xff] %vm852, %v833
        %856 = vst.msk [vmem:[#allocation2 + $0x18] sm:$0xff] %vm852, %v835
        %857 = vst.msk [vmem:[#allocation2 + $0x20] sm:$0xff] %vm852, %v837
        %858 = vst.msk [vmem:[#allocation2 + $0x28] sm:$0xff] %vm852, %v839
        %859 = vst.msk [vmem:[#allocation2 + $0x30] sm:$0xff] %vm852, %v841
        %860 = vst.msk [vmem:[#allocation2 + $0x38] sm:$0xff] %vm852, %v843
        %v862 = vshrl.u32 %v245, 16
        %v864 = vrot.slane %v862, 4
        %v865 = vshll.u32 %v245, 16
        %v867 = vrot.slane %v865, 5
        %v868 = vor.u32 %v864, %v867
        %v869 = vrot.slane %v868, 4
        %v871 = vshll.u32 %v246, 16
        %v873 = vrot.slane %v871, 5
        %v874 = vsel %vm307, %v869, %v873
        %v875 = vshrl.u32 %v246, 16
        %v877 = vrot.slane %v875, 4
        %v878 = vor.u32 %v877, %v873
        %v879 = vrot.slane %v878, 4
        %v881 = vshll.u32 %v247, 16
        %v883 = vrot.slane %v881, 5
        %v884 = vsel %vm307, %v879, %v883
        %v885 = vunpack.c.l.b16 %v874
        %v886 = vunpack.c.l.b16 %v884
        %v887 = vpack.c.b16 %v886, %v885
        %888 = vrot.lane.b32.xlu0 %v518, 28
        %v889 = vpop.permute.xlu0 %888
        %890 = vrot.lane.b32.xlu0 %v519, 28
        %v891 = vpop.permute.xlu0 %890
        %892 = vrot.lane.b32.xlu0 %v520, 28
        %v893 = vpop.permute.xlu0 %892
        %894 = vrot.lane.b32.xlu0 %v521, 28
        %v895 = vpop.permute.xlu0 %894
        %896 = vrot.lane.b32.xlu0 %v522, 28
        %v897 = vpop.permute.xlu0 %896
        %898 = vrot.lane.b32.xlu0 %v523, 28
        %v899 = vpop.permute.xlu0 %898
        %900 = vrot.lane.b32.xlu0 %v745, 28
        %v901 = vpop.permute.xlu0 %900
        %902 = vrot.lane.b32.xlu0 %v887, 28
        %v903 = vpop.permute.xlu0 %902
        %vm912 = vcmask 261344
        %913 = vst.msk [vmem:[#allocation2] sm:$0xff] %vm912, %v889
        %914 = vst.msk [vmem:[#allocation2 + $0x8] sm:$0xff] %vm912, %v891
        %915 = vst.msk [vmem:[#allocation2 + $0x10] sm:$0xff] %vm912, %v893
        %916 = vst.msk [vmem:[#allocation2 + $0x18] sm:$0xff] %vm912, %v895
        %917 = vst.msk [vmem:[#allocation2 + $0x20] sm:$0xff] %vm912, %v897
        %918 = vst.msk [vmem:[#allocation2 + $0x28] sm:$0xff] %vm912, %v899
        %919 = vst.msk [vmem:[#allocation2 + $0x30] sm:$0xff] %vm912, %v901
        %920 = vst.msk [vmem:[#allocation2 + $0x38] sm:$0xff] %vm912, %v903
        %v922 = vrot.slane %v245, 5
        %v923 = vrot.slane %v922, 4
        %v924 = vrot.slane %v246, 5
        %v925 = vsel %vm567, %v923, %v924
        %v926 = vrot.slane %v924, 4
        %v927 = vrot.slane %v247, 5
        %v928 = vsel %vm567, %v926, %v927
        %v929 = vunpack.c.l.b16 %v925
        %v930 = vunpack.c.l.b16 %v928
        %v931 = vpack.c.b16 %v930, %v929
        %932 = vrot.lane.b32.xlu0 %v642, 32
        %v933 = vpop.permute.xlu0 %932
        %934 = vrot.lane.b32.xlu0 %v643, 32
        %v935 = vpop.permute.xlu0 %934
        %936 = vrot.lane.b32.xlu0 %v644, 32
        %v937 = vpop.permute.xlu0 %936
        %938 = vrot.lane.b32.xlu0 %v645, 32
        %v939 = vpop.permute.xlu0 %938
        %940 = vrot.lane.b32.xlu0 %v646, 32
        %v941 = vpop.permute.xlu0 %940
        %942 = vrot.lane.b32.xlu0 %v647, 32
        %v943 = vpop.permute.xlu0 %942
        %944 = vrot.lane.b32.xlu0 %v789, 32
        %v945 = vpop.permute.xlu0 %944
        %946 = vrot.lane.b32.xlu0 %v931, 32
        %v947 = vpop.permute.xlu0 %946
        %vm956 = vcmask 294144
        %957 = vst.msk [vmem:[#allocation2] sm:$0xff] %vm956, %v933
        %958 = vst.msk [vmem:[#allocation2 + $0x8] sm:$0xff] %vm956, %v935
        %959 = vst.msk [vmem:[#allocation2 + $0x10] sm:$0xff] %vm956, %v937
        %960 = vst.msk [vmem:[#allocation2 + $0x18] sm:$0xff] %vm956, %v939
        %961 = vst.msk [vmem:[#allocation2 + $0x20] sm:$0xff] %vm956, %v941
        %962 = vst.msk [vmem:[#allocation2 + $0x28] sm:$0xff] %vm956, %v943
        %963 = vst.msk [vmem:[#allocation2 + $0x30] sm:$0xff] %vm956, %v945
        %964 = vst.msk [vmem:[#allocation2 + $0x38] sm:$0xff] %vm956, %v947
        %v965 = vld [vmem:[#allocation2] sm:$0xff]
        %v966 = vld [vmem:[#allocation2 + $0x8] sm:$0xff]
        %v967 = vld [vmem:[#allocation2 + $0x10] sm:$0xff]
        %v968 = vld [vmem:[#allocation2 + $0x18] sm:$0xff]
        %v969 = vld [vmem:[#allocation2 + $0x20] sm:$0xff]
        %v970 = vld [vmem:[#allocation2 + $0x28] sm:$0xff]
        %v971 = vld [vmem:[#allocation2 + $0x30] sm:$0xff]
        %v972 = vld [vmem:[#allocation2 + $0x38] sm:$0xff]
        %v973 = vld [vmem:[%s1] sm:$0xf]
        %v974 = vld [vmem:[%s1 + $0x4] sm:$0xf]
        %v975 = vld [vmem:[%s1 + $0x8] sm:$0xf]
        %v976 = vld [vmem:[%s1 + $0xc] sm:$0xf]
        %v977 = vld [vmem:[%s1 + $0x10] sm:$0x3]
        %v983 = vunpack.c.l.b16 %v973
        %v984 = vunpack.c.l.b16 %v974
        %v985 = vunpack.c.l.b16 %v975
        %v986 = vunpack.c.l.b16 %v976
        %v987 = vunpack.c.l.b16 %v977
        %v988 = vpack.c.b16 %v984, %v983
        %v989 = vpack.c.b16 %v986, %v985
        %v990 = vpack.c.b16 %v987, %v987
        %vm993 = vcmask 293888
        %v995 = vsel %vm993, %v965, 0
        %v998 = vsel %vm993, %v966, 0
        %v1001 = vsel %vm993, %v967, 0
        %v1004 = vsel %vm993, %v968, 0
        %v1007 = vsel %vm993, %v969, 0
        %v1010 = vsel %vm993, %v970, 0
        %v1013 = vsel %vm993, %v971, 0
        %v1016 = vsel %vm993, %v972, 0
        %vm1018 = vcmask 1041408
        %v1020 = vsel %vm1018, %v990, 0
        %1022 = vmatprep.subr.bf16.mxu0 0
        %1023 = vmatpush1.bf16.msra.mxu0 %v988
        %1024 = vmatprep.subr.bf16.mxu0 0
        %1025 = vmatpush1.bf16.msra.mxu0 %v989
        %1026 = vmatprep.subr.bf16.mxu0 0
        %1027 = vmatpush1.bf16.msra.mxu0 %v1020
        %1028 = vmatprep.subr.bf16.mxu0 0
        %1029 = vmatpush1.bf16.msra.mxu0 0
        %1030 = vmatprep.subr.bf16.mxu0 0
        %1031 = vmatpush1.bf16.msra.mxu0 0
        %1032 = vmatprep.subr.bf16.mxu0 0
        %1033 = vmatpush1.bf16.msra.mxu0 0
        %1034 = vmatprep.subr.bf16.mxu0 0
        %1035 = vmatpush1.bf16.msra.mxu0 0
        %1036 = vmatprep.subr.bf16.mxu0 0
        %1037 = vmatpush1.bf16.msra.mxu0 0
        %1038 = vmatprep.subr.bf16.mxu0 0
        %1039 = vmatpush1.bf16.msra.mxu0 0
        %1040 = vmatprep.subr.bf16.mxu0 0
        %1041 = vmatpush1.bf16.msra.mxu0 0
        %1042 = vmatprep.subr.bf16.mxu0 0
        %1043 = vmatpush1.bf16.msra.mxu0 0
        %1044 = vmatprep.subr.bf16.mxu0 0
        %1045 = vmatpush1.bf16.msra.mxu0 0
        %1046 = vmatprep.subr.bf16.mxu0 0
        %1047 = vmatpush1.bf16.msra.mxu0 0
        %1048 = vmatprep.subr.bf16.mxu0 0
        %1049 = vmatpush1.bf16.msra.mxu0 0
        %1050 = vmatprep.subr.bf16.mxu0 0
        %1051 = vmatpush1.bf16.msra.mxu0 0
        %1052 = vmatprep.subr.bf16.mxu0 0
        %1053 = vmatpush1.bf16.msra.mxu0 0
        %1054 = vmatprep.mubr.bf16.mxu0 0
        %1055 = vmatmul.mubr.bf16.gmra.mrb[0].mxu0 %v995
        %v1056 = vpop.f32.mrb[0].mxu0
        %v1057 = vadd.f32 0.0, %v1056
        %v1058 = vpop.f32.mrb[0].mxu0
        %v1059 = vpop.f32.mrb[0].mxu0
        %v1060 = vadd.f32 0.0, %v1059
        %v1061 = vpop.f32.mrb[0].mxu0
        %1062 = vmatprep.mubr.bf16.mxu0 0
        %1063 = vmatmul.mubr.bf16.gmra.mrb[0].mxu0 %v998
        %v1064 = vpop.f32.mrb[0].mxu0
        %v1065 = vadd.f32 0.0, %v1064
        %v1066 = vpop.f32.mrb[0].mxu0
        %v1067 = vpop.f32.mrb[0].mxu0
        %v1068 = vadd.f32 0.0, %v1067
        %v1069 = vpop.f32.mrb[0].mxu0
        %1070 = vmatprep.mubr.bf16.mxu0 0
        %1071 = vmatmul.mubr.bf16.gmra.mrb[0].mxu0 %v1001
        %v1072 = vpop.f32.mrb[0].mxu0
        %v1073 = vadd.f32 0.0, %v1072
        %v1074 = vpop.f32.mrb[0].mxu0
        %v1075 = vpop.f32.mrb[0].mxu0
        %v1076 = vadd.f32 0.0, %v1075
        %v1077 = vpop.f32.mrb[0].mxu0
        %1078 = vmatprep.mubr.bf16.mxu0 0
        %1079 = vmatmul.mubr.bf16.gmra.mrb[0].mxu0 %v1004
        %v1080 = vpop.f32.mrb[0].mxu0
        %v1081 = vadd.f32 0.0, %v1080
        %v1082 = vpop.f32.mrb[0].mxu0
        %v1083 = vpop.f32.mrb[0].mxu0
        %v1084 = vadd.f32 0.0, %v1083
        %v1085 = vpop.f32.mrb[0].mxu0
        %1086 = vmatprep.mubr.bf16.mxu0 0
        %1087 = vmatmul.mubr.bf16.gmra.mrb[0].mxu0 %v1007
        %v1088 = vpop.f32.mrb[0].mxu0
        %v1089 = vadd.f32 0.0, %v1088
        %v1090 = vpop.f32.mrb[0].mxu0
        %v1091 = vpop.f32.mrb[0].mxu0
        %v1092 = vadd.f32 0.0, %v1091
        %v1093 = vpop.f32.mrb[0].mxu0
        %1094 = vmatprep.mubr.bf16.mxu0 0
        %1095 = vmatmul.mubr.bf16.gmra.mrb[0].mxu0 %v1010
        %v1096 = vpop.f32.mrb[0].mxu0
        %v1097 = vadd.f32 0.0, %v1096
        %v1098 = vpop.f32.mrb[0].mxu0
        %v1099 = vpop.f32.mrb[0].mxu0
        %v1100 = vadd.f32 0.0, %v1099
        %v1101 = vpop.f32.mrb[0].mxu0
        %1102 = vmatprep.mubr.bf16.mxu0 0
        %1103 = vmatmul.mubr.bf16.gmra.mrb[0].mxu0 %v1013
        %v1104 = vpop.f32.mrb[0].mxu0
        %v1105 = vadd.f32 0.0, %v1104
        %v1106 = vpop.f32.mrb[0].mxu0
        %v1107 = vpop.f32.mrb[0].mxu0
        %v1108 = vadd.f32 0.0, %v1107
        %v1109 = vpop.f32.mrb[0].mxu0
        %1110 = vmatprep.mubr.bf16.mxu0 0
        %1111 = vmatmul.mubr.bf16.gmra.mrb[0].mxu0 %v1016
        %v1112 = vpop.f32.mrb[0].mxu0
        %v1113 = vadd.f32 0.0, %v1112
        %v1114 = vpop.f32.mrb[0].mxu0
        %v1115 = vpop.f32.mrb[0].mxu0
        %v1116 = vadd.f32 0.0, %v1115
        %v1117 = vpop.f32.mrb[0].mxu0
        %1118 = vdwg.mxu0
        %v1119 = vpack.c.bf16 %v1060, %v1057
        %v1120 = vpack.c.bf16 %v1068, %v1065
        %v1121 = vpack.c.bf16 %v1076, %v1073
        %v1122 = vpack.c.bf16 %v1084, %v1081
        %v1123 = vpack.c.bf16 %v1092, %v1089
        %v1124 = vpack.c.bf16 %v1100, %v1097
        %v1125 = vpack.c.bf16 %v1108, %v1105
        %v1126 = vpack.c.bf16 %v1116, %v1113
        %v1135 = vunpack.c.l.b16 %v1119
        %v1136 = vunpack.c.h.b16 %v1119
        %v1137 = vunpack.c.l.b16 %v1120
        %v1138 = vunpack.c.h.b16 %v1120
        %v1139 = vunpack.c.l.b16 %v1121
        %v1140 = vunpack.c.h.b16 %v1121
        %v1141 = vunpack.c.l.b16 %v1122
        %v1142 = vunpack.c.h.b16 %v1122
        %v1143 = vunpack.c.l.b16 %v1123
        %v1144 = vunpack.c.h.b16 %v1123
        %v1145 = vunpack.c.l.b16 %v1124
        %v1146 = vunpack.c.h.b16 %v1124
        %v1147 = vunpack.c.l.b16 %v1125
        %v1148 = vunpack.c.h.b16 %v1125
        %v1149 = vunpack.c.l.b16 %v1126
        %v1150 = vunpack.c.h.b16 %v1126
        %v1151 = vpack.c.b16 %v1135, %v1135
        %v1152 = vpack.c.b16 %v1136, %v1136
        %v1153 = vpack.c.b16 %v1137, %v1137
        %v1154 = vpack.c.b16 %v1138, %v1138
        %v1155 = vpack.c.b16 %v1139, %v1139
        %v1156 = vpack.c.b16 %v1140, %v1140
        %v1157 = vpack.c.b16 %v1141, %v1141
        %v1158 = vpack.c.b16 %v1142, %v1142
        %v1159 = vpack.c.b16 %v1143, %v1143
        %v1160 = vpack.c.b16 %v1144, %v1144
        %v1161 = vpack.c.b16 %v1145, %v1145
        %v1162 = vpack.c.b16 %v1146, %v1146
        %v1163 = vpack.c.b16 %v1147, %v1147
        %v1164 = vpack.c.b16 %v1148, %v1148
        %v1165 = vpack.c.b16 %v1149, %v1149
        %v1166 = vpack.c.b16 %v1150, %v1150
        %vm1183 = vcmask 60416
        %1184 = vst.msk [vmem:[%s216] sm:$0xf] %vm1183, %v1151
        %1185 = vst.msk [vmem:[%s216 + $0x4] sm:$0xf] %vm1183, %v1152
        %1186 = vst.msk [vmem:[%s216 + $0x8] sm:$0xf] %vm1183, %v1153
        %1187 = vst.msk [vmem:[%s216 + $0xc] sm:$0xf] %vm1183, %v1154
        %1188 = vst.msk [vmem:[%s216 + $0x10] sm:$0xf] %vm1183, %v1155
        %1189 = vst.msk [vmem:[%s216 + $0x14] sm:$0xf] %vm1183, %v1156
        %1190 = vst.msk [vmem:[%s216 + $0x18] sm:$0xf] %vm1183, %v1157
        %1191 = vst.msk [vmem:[%s216 + $0x1c] sm:$0xf] %vm1183, %v1158
        %1192 = vst.msk [vmem:[%s216 + $0x20] sm:$0xf] %vm1183, %v1159
        %1193 = vst.msk [vmem:[%s216 + $0x24] sm:$0xf] %vm1183, %v1160
        %1194 = vst.msk [vmem:[%s216 + $0x28] sm:$0xf] %vm1183, %v1161
        %1195 = vst.msk [vmem:[%s216 + $0x2c] sm:$0xf] %vm1183, %v1162
        %1196 = vst.msk [vmem:[%s216 + $0x30] sm:$0xf] %vm1183, %v1163
        %1197 = vst.msk [vmem:[%s216 + $0x34] sm:$0xf] %vm1183, %v1164
        %1198 = vst.msk [vmem:[%s216 + $0x38] sm:$0xf] %vm1183, %v1165
        %1199 = vst.msk [vmem:[%s216 + $0x3c] sm:$0xf] %vm1183, %v1166
        %v1200 = vadd.f32 %v1057, %v1060
        %v1201 = vadd.f32 %v1200, %v1065
        %v1202 = vadd.f32 %v1201, %v1068
        %v1203 = vadd.f32 %v1202, %v1073
        %v1204 = vadd.f32 %v1203, %v1076
        %v1205 = vadd.f32 %v1204, %v1081
        %v1206 = vadd.f32 %v1205, %v1084
        %v1207 = vadd.f32 %v1206, %v1089
        %v1208 = vadd.f32 %v1207, %v1092
        %v1209 = vadd.f32 %v1208, %v1097
        %v1210 = vadd.f32 %v1209, %v1100
        %v1211 = vadd.f32 %v1210, %v1105
        %v1212 = vadd.f32 %v1211, %v1108
        %v1213 = vadd.f32 %v1212, %v1113
        %v1214 = vadd.f32 %v1213, %v1116
        %v1215 = vrot.slane %v1214, 4
        %v1216 = vadd.f32 %v1214, %v1215
        %v1217 = vrot.slane %v1216, 2
        %v1218 = vadd.f32 %v1216, %v1217
        %v1219 = vrot.slane %v1218, 1
        %v1220 = vadd.f32 %v1218, %v1219
        %1221 = vst [vmem:[%s200] sm:$0x1] %v1220
        %v1222 = vmul.f32 %v1057, %v1057
        %v1223 = vmul.f32 %v1060, %v1060
        %v1224 = vmul.f32 %v1065, %v1065
        %v1225 = vmul.f32 %v1068, %v1068
        %v1226 = vmul.f32 %v1073, %v1073
        %v1227 = vmul.f32 %v1076, %v1076
        %v1228 = vmul.f32 %v1081, %v1081
        %v1229 = vmul.f32 %v1084, %v1084
        %v1230 = vmul.f32 %v1089, %v1089
        %v1231 = vmul.f32 %v1092, %v1092
        %v1232 = vmul.f32 %v1097, %v1097
        %v1233 = vmul.f32 %v1100, %v1100
        %v1234 = vmul.f32 %v1105, %v1105
        %v1235 = vmul.f32 %v1108, %v1108
        %v1236 = vmul.f32 %v1113, %v1113
        %v1237 = vmul.f32 %v1116, %v1116
        %v1238 = vadd.f32 %v1222, %v1223
        %v1239 = vadd.f32 %v1238, %v1224
        %v1240 = vadd.f32 %v1239, %v1225
        %v1241 = vadd.f32 %v1240, %v1226
        %v1242 = vadd.f32 %v1241, %v1227
        %v1243 = vadd.f32 %v1242, %v1228
        %v1244 = vadd.f32 %v1243, %v1229
        %v1245 = vadd.f32 %v1244, %v1230
        %v1246 = vadd.f32 %v1245, %v1231
        %v1247 = vadd.f32 %v1246, %v1232
        %v1248 = vadd.f32 %v1247, %v1233
        %v1249 = vadd.f32 %v1248, %v1234
        %v1250 = vadd.f32 %v1249, %v1235
        %v1251 = vadd.f32 %v1250, %v1236
        %v1252 = vadd.f32 %v1251, %v1237
        %v1253 = vrot.slane %v1252, 4
        %v1254 = vadd.f32 %v1252, %v1253
        %v1255 = vrot.slane %v1254, 2
        %v1256 = vadd.f32 %v1254, %v1255
        %v1257 = vrot.slane %v1256, 1
        %v1258 = vadd.f32 %v1256, %v1257
        %1259 = vst [vmem:[%s206] sm:$0x1] %v1258
        %p1260 = scmp.lt.s32.totalorder %s22, 3
        %s1261 = scalar_select %p1260, %s22, 3
        %s1262 = smul.addr %s1261, 16
        %s1263 = smul.addr %s1262, 4
        %s1264 = scalar_lea.vmem %s2, %s1263
        %s1265 = sand.u32 %s103, 1
        %s1266 = scalar_lea.sflag [#allocation4], %s1265
        %s1267 = sand.u32 %s103, 1
        %s1268 = scalar_lea.vmem [#allocation3], %s1267
        %s1269 = sand.u32 %s129, 1
        %s1270 = scalar_lea.sflag [#allocation6], %s1269
        %s1271 = sand.u32 %s129, 1
        %s1272 = scalar_lea.vmem [#allocation5], %s1271
        // Predicated region
        $region29: #{tpu_custom_call.1} parent=27 // pred_check
          %p1273 = pneg %p87
        $region30: #{tpu_custom_call.1} parent=27 // pred_check_branch
          %1275 = sbr.rel (%p1273) target = $region32
        $region31: #{tpu_custom_call.1} parent=27 // pred_region
          _
        $region32: #{tpu_custom_call.1} parent=27 // pred_fallthru
          _
        // Predicated region
        $region33: #{tpu_custom_call.1} parent=27 // pred_check
          %p1276 = pneg %p113
        $region34: #{tpu_custom_call.1} parent=27 // pred_check_branch
          %1278 = sbr.rel (%p1276) target = $region36
        $region35: #{tpu_custom_call.1} parent=27 // pred_region
          %s1280 = ssub.s32 16, 16
          %1281 = vsyncadd %s1266, %s1280
          %s1282 = smul.addr %s22, 16
          %s1283 = scalar_lea.hbm %s3, %s1282
          %s1285 = sshll.u32 %s1268, 4
          %s1286 = int_to_ptr.vmem [resolvable:$true] %s1285
          %1288 = dma.vmem_to_hbm [thread:$0]  %s1286, 16, %s1283, %s1266
        $region36: #{tpu_custom_call.1} parent=27 // pred_fallthru
          _
        // Predicated region
        $region37: #{tpu_custom_call.1} parent=27 // pred_check
          %p1289 = pneg %p139
        $region38: #{tpu_custom_call.1} parent=27 // pred_check_branch
          %1291 = sbr.rel (%p1289) target = $region40
        $region39: #{tpu_custom_call.1} parent=27 // pred_region
          %s1293 = ssub.s32 16, 16
          %1294 = vsyncadd %s1270, %s1293
          %s1295 = smul.addr %s22, 16
          %s1296 = scalar_lea.hbm %s4, %s1295
          %s1298 = sshll.u32 %s1272, 4
          %s1299 = int_to_ptr.vmem [resolvable:$true] %s1298
          %1301 = dma.vmem_to_hbm [thread:$0]  %s1299, 16, %s1296, %s1270
        $region40: #{tpu_custom_call.1} parent=27 // pred_fallthru
          _
      $region28: #{tpu_custom_call.1} parent=5 // pred_fallthru
        _
      %p1302 = scmp.le.s32.totalorder 2, %s17
      // Predicated region
      $region41: #{tpu_custom_call.1} parent=5 // pred_check
        %p1303 = pneg %p1302
      $region42: #{tpu_custom_call.1} parent=5 // pred_check_branch
        %1305 = sbr.rel (%p1303) target = $region44
      $region43: #{tpu_custom_call.1} parent=5 // pred_region
        %s1306 = ssub.s32 %s17, 2
        // Predicated region
        $region45: #{tpu_custom_call.1} parent=43 // pred_check
          %p1307 = pneg %p93
        $region46: #{tpu_custom_call.1} parent=43 // pred_check_branch
          %1309 = sbr.rel (%p1307) target = $region48
        $region47: #{tpu_custom_call.1} parent=43 // pred_region
          %p1310 = scmp.lt.s32.totalorder %s23, 3
          %s1311 = scalar_select %p1310, %s23, 3
          %s1312 = smul.addr %s1311, 16
          %s1313 = smul.addr %s1312, 4
          %s1314 = scalar_lea.vmem %s2, %s1313
        $region48: #{tpu_custom_call.1} parent=43 // pred_fallthru
          _
        // Predicated region
        $region49: #{tpu_custom_call.1} parent=43 // pred_check
          %p1315 = pneg %p119
        $region50: #{tpu_custom_call.1} parent=43 // pred_check_branch
          %1317 = sbr.rel (%p1315) target = $region52
        $region51: #{tpu_custom_call.1} parent=43 // pred_region
          %s1318 = sand.u32 %s104, 1
          %s1319 = scalar_lea.sflag [#allocation4], %s1318
          %s1320 = sand.u32 %s104, 1
          %s1321 = scalar_lea.vmem [#allocation3], %s1320
          %1322 = dma.done %s1319, 16
        $region52: #{tpu_custom_call.1} parent=43 // pred_fallthru
          _
        // Predicated region
        $region53: #{tpu_custom_call.1} parent=43 // pred_check
          %p1323 = pneg %p145
        $region54: #{tpu_custom_call.1} parent=43 // pred_check_branch
          %1325 = sbr.rel (%p1323) target = $region56
        $region55: #{tpu_custom_call.1} parent=43 // pred_region
          %s1326 = sand.u32 %s130, 1
          %s1327 = scalar_lea.sflag [#allocation6], %s1326
          %s1328 = sand.u32 %s130, 1
          %s1329 = scalar_lea.vmem [#allocation5], %s1328
          %1330 = dma.done %s1327, 16
        $region56: #{tpu_custom_call.1} parent=43 // pred_fallthru
          _
      $region44: #{tpu_custom_call.1} parent=5 // pred_fallthru
        _
    $region6: #{tpu_custom_call.1} parent=1 // loop_footer
      %s21 = sadd.s32 1, %s17
    $region7: #{tpu_custom_call.1} parent=1 // loop_footer_branch
      %16 = sbr.rel target = $region3
    $region8: #{tpu_custom_call.1} parent=1 // loop_exit
      _
    %1331 = vsyncpa [#allocation4], 1
    %s1332 = scalar_lea.sflag [#allocation4], 1
    %1333 = vsyncpa %s1332, 1
    %1334 = vsyncpa [#allocation6], 1
    %s1335 = scalar_lea.sflag [#allocation6], 1
    %1336 = vsyncpa %s1335, 1

</llo_original>
